<compile_context>
chip_gen: v6e
topology: v6e:2x2x1
jax: 0.10.0
libtpu: 0.0.40
codegen_flags: <defaults>
</compile_context>

<pallas_src>
import functools

import jax
import jax.numpy as jnp
from jax.experimental import pallas as pl
from jax.experimental.pallas import tpu as pltpu


def _round_up(n, m):
    return (n + m - 1) // m * m


def dqn_kernel(x_ref, w1_ref, b1_ref, w2_ref, b2_ref, w3_ref, b3_ref, o_ref):
    # fc1 + relu: f32 x f32 (K=4) -> f32.  Keeps full input precision; the
    # tiny-K matmul is fill/drain bound either way, so f32 here is free.
    x = x_ref[...]
    h1 = jnp.dot(x, w1_ref[...], preferred_element_type=jnp.float32) + b1_ref[...]
    h1 = jnp.maximum(h1, 0.0).astype(jnp.bfloat16)

    # fc2 + relu: bf16 x bf16 -> f32 accumulate on the MXU, ReLU in f32 on VPU.
    h2 = jnp.dot(h1, w2_ref[...], preferred_element_type=jnp.float32) + b2_ref[...]
    h2 = jnp.maximum(h2, 0.0).astype(jnp.bfloat16)

    # fc3: raw Q-values, no activation.
    o_ref[...] = (
        jnp.dot(h2, w3_ref[...], preferred_element_type=jnp.float32) + b3_ref[...]
    ).astype(o_ref.dtype)


@functools.partial(jax.jit, static_argnames=("block_b",))
def dqn_forward(x, w1, b1, w2, b2, w3, b3, *, block_b=2048):
    """x: (B, state_size) f32.  Returns (B, action_size) f32 Q-values."""
    B, S = x.shape
    H1 = w1.shape[1]
    H2 = w2.shape[1]
    A = w3.shape[1]

    # Guard block_b: must be a multiple of 8, at least 8.
    block_b = max(8, _round_up(int(block_b), 8))

    if B <= block_b:
        # Typical DQN batches: one big tile, grid=(1,) -> one MXU push per
        # matmul, no per-step overhead, at most 7 padding rows.
        n_tiles = 1
        Bt = _round_up(B, 8)
    else:
        # Multi-tile path: size tiles to minimize padding (<=7 rows per tile).
        n_tiles = pl.cdiv(B, block_b)
        Bt = _round_up(pl.cdiv(B, n_tiles), 8)
    Bp = n_tiles * Bt

    if Bp != B:  # only pad when B isn't already tile-aligned
        x = jnp.pad(x, ((0, Bp - B), (0, 0)))

    # Weights for fc2/fc3 cast to bf16 once (tiny, ~33 KB); fc1 stays f32.
    w2_bf = w2.astype(jnp.bfloat16)
    w3_bf = w3.astype(jnp.bfloat16)

    # Weights / biases: full-array block, constant index_map -> DMA'd once,
    # resident in VMEM across all batch tiles.
    resident = lambda a: pl.BlockSpec(a.shape, lambda i: (0, 0))

    flops = 2 * Bp * (S * H1 + H1 * H2 + H2 * A)
    bytes_accessed = (
        Bp * S * 4                                   # f32 input
        + w1.size * 4 + (w2_bf.size + w3_bf.size) * 2  # weights
        + (b1.size + b2.size + b3.size) * 4            # f32 biases
        + Bp * A * 4                                   # f32 output
    )

    out = pl.pallas_call(
        dqn_kernel,
        out_shape=jax.ShapeDtypeStruct((Bp, A), jnp.float32),
        grid=(n_tiles,),
        in_specs=[
            pl.BlockSpec((Bt, S), lambda i: (i, 0)),   # batch-tiled input
            resident(w1), resident(b1),
            resident(w2_bf), resident(b2),
            resident(w3_bf), resident(b3),
        ],
        out_specs=pl.BlockSpec((Bt, A), lambda i: (i, 0)),
        compiler_params=pltpu.CompilerParams(
            dimension_semantics=("parallel",),   # shards tiles across v7x's 2 TCs
            vmem_limit_bytes=32 << 20,           # safe on v7x's 64 MiB VMEM too
        ),
        cost_estimate=pl.CostEstimate(
            flops=flops, transcendentals=0, bytes_accessed=bytes_accessed
        ),
    )(x, w1, b1, w2_bf, b2, w3_bf, b3)

    return out[:B]


def init_params(key, state_size, action_size, hidden1=64, hidden2=128):
    """Deterministic init mimicking PyTorch Linear default (U(-1/sqrt(fan_in), +))."""
    ks = jax.random.split(key, 6)

    def linear(kw, kb, fan_in, fan_out):
        bound = 1.0 / jnp.sqrt(jnp.float32(fan_in))
        w = jax.random.uniform(kw, (fan_in, fan_out), jnp.float32, -bound, bound)
        b = jax.random.uniform(kb, (1, fan_out), jnp.float32, -bound, bound)
        return w, b

    w1, b1 = linear(ks[0], ks[1], state_size, hidden1)
    w2, b2 = linear(ks[2], ks[3], hidden1, hidden2)
    w3, b3 = linear(ks[4], ks[5], hidden2, action_size)
    return w1, b1, w2, b2, w3, b3


def reference_forward_kernel_math(x, w1, b1, w2, b2, w3, b3):
    """Plain-JAX reference matching the kernel's math exactly (f32 fc1, bf16 fc2/fc3)."""
    h1 = jnp.dot(x, w1, preferred_element_type=jnp.float32) + b1
    h1 = jnp.maximum(h1, 0.0).astype(jnp.bfloat16)
    h2 = jnp.dot(h1, w2.astype(jnp.bfloat16), preferred_element_type=jnp.float32) + b2
    h2 = jnp.maximum(h2, 0.0).astype(jnp.bfloat16)
    return jnp.dot(h2, w3.astype(jnp.bfloat16), preferred_element_type=jnp.float32) + b3


def reference_forward_f32(x, w1, b1, w2, b2, w3, b3):
    """Pure-f32 reference (PyTorch forward semantics)."""
    h1 = jnp.maximum(jnp.dot(x, w1) + b1, 0.0)
    h2 = jnp.maximum(jnp.dot(h1, w2) + b2, 0.0)
    return jnp.dot(h2, w3) + b3


if __name__ == "__main__":
    # CartPole-v1: state_size=4, action_size=2
    state_size, action_size = 4, 2

    key = jax.random.PRNGKey(0)
    k_x, k_x2, k_p = jax.random.split(key, 3)
    params = init_params(k_p, state_size, action_size)

    # Small per-step style batch (single tile, no padding).
    x_small = jax.random.normal(k_x, (8, state_size), jnp.float32)
    q_small = jax.block_until_ready(dqn_forward(x_small, *params))
    assert q_small.shape == (8, action_size)
    assert jnp.allclose(
        q_small, reference_forward_kernel_math(x_small, *params), atol=2e-3, rtol=2e-3
    )
    assert jnp.allclose(
        q_small, reference_forward_f32(x_small, *params), atol=5e-2, rtol=5e-2
    )

    # Replay-minibatch style batch: default block_b -> single tile with 4 pad rows.
    x_big = jax.random.normal(k_x2, (300, state_size), jnp.float32)
    q_big = jax.block_until_ready(dqn_forward(x_big, *params))
    assert q_big.shape == (300, action_size)
    assert jnp.allclose(
        q_big, reference_forward_kernel_math(x_big, *params), atol=2e-3, rtol=2e-3
    )

    # Force the multi-tile path (3 tiles of 104 rows) to exercise the grid.
    q_tiled = jax.block_until_ready(dqn_forward(x_big, *params, block_b=128))
    assert q_tiled.shape == (300, action_size)
    assert jnp.allclose(
        q_tiled, reference_forward_kernel_math(x_big, *params), atol=2e-3, rtol=2e-3
    )

    print("KERNEL_OK")
</pallas_src>

<mosaic_0001>
module attributes {stable_mosaic.version = 11 : i64} {
  func.func @dqn_kernel(%arg0: i32, %arg1: memref<8x4xf32, #tpu.memory_space<vmem>>, %arg2: memref<4x64xf32, #tpu.memory_space<vmem>>, %arg3: memref<1x64xf32, #tpu.memory_space<vmem>>, %arg4: memref<64x128xbf16, #tpu.memory_space<vmem>>, %arg5: memref<1x128xf32, #tpu.memory_space<vmem>>, %arg6: memref<128x2xbf16, #tpu.memory_space<vmem>>, %arg7: memref<1x2xf32, #tpu.memory_space<vmem>>, %arg8: memref<8x2xf32, #tpu.memory_space<vmem>>) attributes {dimension_semantics = [#tpu.dimension_semantics<parallel>], iteration_bounds = array<i64: 1>, scalar_prefetch = 0 : i64, scratch_operands = 0 : i64, tpu.core_type = #tpu.core_type<tc>, window_params = [{transform_indices = @transform_0, window_bounds = array<i64: 8, 4>}, {pipeline_mode = #tpu.pipeline_mode<synchronous>, transform_indices = @transform_1, window_bounds = array<i64: 4, 64>}, {pipeline_mode = #tpu.pipeline_mode<synchronous>, transform_indices = @transform_2, window_bounds = array<i64: 1, 64>}, {pipeline_mode = #tpu.pipeline_mode<synchronous>, transform_indices = @transform_3, window_bounds = array<i64: 64, 128>}, {pipeline_mode = #tpu.pipeline_mode<synchronous>, transform_indices = @transform_4, window_bounds = array<i64: 1, 128>}, {pipeline_mode = #tpu.pipeline_mode<synchronous>, transform_indices = @transform_5, window_bounds = array<i64: 128, 2>}, {pipeline_mode = #tpu.pipeline_mode<synchronous>, transform_indices = @transform_6, window_bounds = array<i64: 1, 2>}, {transform_indices = @transform_7, window_bounds = array<i64: 8, 2>}]} {
    %c0 = arith.constant 0 : index
    %c0_0 = arith.constant 0 : index
    %0 = vector.load %arg1[%c0, %c0_0] : memref<8x4xf32, #tpu.memory_space<vmem>>, vector<8x4xf32>
    %c0_1 = arith.constant 0 : index
    %c0_2 = arith.constant 0 : index
    %1 = vector.load %arg2[%c0_1, %c0_2] : memref<4x64xf32, #tpu.memory_space<vmem>>, vector<4x64xf32>
    %cst = arith.constant dense<0.000000e+00> : vector<8x64xf32>
    %2 = tpu.matmul %0, %1, %cst {dimension_numbers = #tpu.dot_dimension_numbers<[1], [0], [0], [1], [0, 0, 1, 1], [], []>} : vector<8x4xf32>, vector<4x64xf32>, vector<8x64xf32> -> vector<8x64xf32>
    %c0_3 = arith.constant 0 : index
    %c0_4 = arith.constant 0 : index
    %3 = vector.load %arg3[%c0_3, %c0_4] : memref<1x64xf32, #tpu.memory_space<vmem>>, vector<1x64xf32>
    %4 = vector.broadcast %3 : vector<1x64xf32> to vector<8x64xf32>
    %5 = arith.addf %2, %4 : vector<8x64xf32>
    %cst_5 = arith.constant 0.000000e+00 : f32
    %6 = vector.broadcast %cst_5 : f32 to vector<8x64xf32>
    %7 = arith.maximumf %5, %6 : vector<8x64xf32>
    %8 = arith.truncf %7 : vector<8x64xf32> to vector<8x64xbf16>
    %c0_6 = arith.constant 0 : index
    %c0_7 = arith.constant 0 : index
    %9 = vector.load %arg4[%c0_6, %c0_7] : memref<64x128xbf16, #tpu.memory_space<vmem>>, vector<64x128xbf16>
    %cst_8 = arith.constant dense<0.000000e+00> : vector<8x128xf32>
    %10 = tpu.matmul %8, %9, %cst_8 {dimension_numbers = #tpu.dot_dimension_numbers<[1], [0], [0], [1], [0, 0, 1, 1], [], []>} : vector<8x64xbf16>, vector<64x128xbf16>, vector<8x128xf32> -> vector<8x128xf32>
    %c0_9 = arith.constant 0 : index
    %c0_10 = arith.constant 0 : index
    %11 = vector.load %arg5[%c0_9, %c0_10] : memref<1x128xf32, #tpu.memory_space<vmem>>, vector<1x128xf32>
    %12 = vector.broadcast %11 : vector<1x128xf32> to vector<8x128xf32>
    %13 = arith.addf %10, %12 : vector<8x128xf32>
    %cst_11 = arith.constant 0.000000e+00 : f32
    %14 = vector.broadcast %cst_11 : f32 to vector<8x128xf32>
    %15 = arith.maximumf %13, %14 : vector<8x128xf32>
    %16 = arith.truncf %15 : vector<8x128xf32> to vector<8x128xbf16>
    %c0_12 = arith.constant 0 : index
    %c0_13 = arith.constant 0 : index
    %17 = vector.load %arg6[%c0_12, %c0_13] : memref<128x2xbf16, #tpu.memory_space<vmem>>, vector<128x2xbf16>
    %cst_14 = arith.constant dense<0.000000e+00> : vector<8x2xf32>
    %18 = tpu.matmul %16, %17, %cst_14 {dimension_numbers = #tpu.dot_dimension_numbers<[1], [0], [0], [1], [0, 0, 1, 1], [], []>} : vector<8x128xbf16>, vector<128x2xbf16>, vector<8x2xf32> -> vector<8x2xf32>
    %c0_15 = arith.constant 0 : index
    %c0_16 = arith.constant 0 : index
    %19 = vector.load %arg7[%c0_15, %c0_16] : memref<1x2xf32, #tpu.memory_space<vmem>>, vector<1x2xf32>
    %20 = vector.broadcast %19 : vector<1x2xf32> to vector<8x2xf32>
    %21 = arith.addf %18, %20 : vector<8x2xf32>
    %c0_17 = arith.constant 0 : index
    %c0_18 = arith.constant 0 : index
    %22 = vector.load %arg8[%c0_17, %c0_18] : memref<8x2xf32, #tpu.memory_space<vmem>>, vector<8x2xf32>
    tpu.vector_store %arg8[%c0_17, %c0_18], %21 {strides = array<i32>} : memref<8x2xf32, #tpu.memory_space<vmem>>, vector<8x2xf32>,
    return
  }
  func.func @transform_0(%arg0: i32) -> (i32, i32) {
    %c0_i32 = arith.constant 0 : i32
    %c0_i32_0 = arith.constant 0 : i32
    return %arg0, %c0_i32 : i32, i32
  }
  func.func @transform_1(%arg0: i32) -> (i32, i32) {
    %c0_i32 = arith.constant 0 : i32
    %c0_i32_0 = arith.constant 0 : i32
    %c0_i32_1 = arith.constant 0 : i32
    return %c0_i32, %c0_i32_0 : i32, i32
  }
  func.func @transform_2(%arg0: i32) -> (i32, i32) {
    %c0_i32 = arith.constant 0 : i32
    %c0_i32_0 = arith.constant 0 : i32
    %c0_i32_1 = arith.constant 0 : i32
    return %c0_i32, %c0_i32_0 : i32, i32
  }
  func.func @transform_3(%arg0: i32) -> (i32, i32) {
    %c0_i32 = arith.constant 0 : i32
    %c0_i32_0 = arith.constant 0 : i32
    %c0_i32_1 = arith.constant 0 : i32
    return %c0_i32, %c0_i32_0 : i32, i32
  }
  func.func @transform_4(%arg0: i32) -> (i32, i32) {
    %c0_i32 = arith.constant 0 : i32
    %c0_i32_0 = arith.constant 0 : i32
    %c0_i32_1 = arith.constant 0 : i32
    return %c0_i32, %c0_i32_0 : i32, i32
  }
  func.func @transform_5(%arg0: i32) -> (i32, i32) {
    %c0_i32 = arith.constant 0 : i32
    %c0_i32_0 = arith.constant 0 : i32
    %c0_i32_1 = arith.constant 0 : i32
    return %c0_i32, %c0_i32_0 : i32, i32
  }
  func.func @transform_6(%arg0: i32) -> (i32, i32) {
    %c0_i32 = arith.constant 0 : i32
    %c0_i32_0 = arith.constant 0 : i32
    %c0_i32_1 = arith.constant 0 : i32
    return %c0_i32, %c0_i32_0 : i32, i32
  }
  func.func @transform_7(%arg0: i32) -> (i32, i32) {
    %c0_i32 = arith.constant 0 : i32
    %c0_i32_0 = arith.constant 0 : i32
    return %arg0, %c0_i32 : i32, i32
  }
}

</mosaic_0001>

<llo_original>
// kernel: dqn_forward.1
$region0: #{dqn_forward.1}
  #allocation0 [shape = 'u32[]', space=smem, size = 0x4, offset = 0x4, fixed_abs, tag = 'smem constant byte address 0x4 - core index']
  #allocation1 [shape = 'u32[144,128]{1,0:T(1,128)}', space=vmem, size = 0x12000, scoped, tag = 'internal scratch']
  %s0 = inlined_call_operand.vmem [shape: f32[8,4], index: 0, kind: input, shape index: {}]
  %s1 = inlined_call_operand.vmem [shape: f32[4,64], index: 1, kind: input, shape index: {}]
  %s2 = inlined_call_operand.vmem [shape: f32[1,64], index: 2, kind: input, shape index: {}]
  %s3 = inlined_call_operand.vmem [shape: bf16[64,128], index: 3, kind: input, shape index: {}]
  %s4 = inlined_call_operand.vmem [shape: f32[1,128], index: 4, kind: input, shape index: {}]
  %s5 = inlined_call_operand.vmem [shape: bf16[128,2], index: 5, kind: input, shape index: {}]
  %s6 = inlined_call_operand.vmem [shape: f32[1,2], index: 6, kind: input, shape index: {}]
  %s7 = inlined_call_operand.vmem [shape: f32[8,2], index: 7, kind: output, shape index: {}]
  %s8 = sld [smem:[#allocation0]]
  $region38: #{dqn_forward.1} parent=0
    _
  %s10 = ssub.s32 1, %s8
  %s11 = scalar_select 0, %s10, %s8
  // Predicated region
  $region2: #{dqn_forward.1} parent=0 // pred_check
    _
  $region3: #{dqn_forward.1} parent=0 // pred_check_branch
    %13 = sbr.rel (0) target = $region5
  $region4: #{dqn_forward.1} parent=0 // pred_region
    _
  $region5: #{dqn_forward.1} parent=0 // pred_fallthru
    _
  // Predicated region
  $region6: #{dqn_forward.1} parent=0 // pred_check
    _
  $region7: #{dqn_forward.1} parent=0 // pred_check_branch
    %15 = sbr.rel (0) target = $region9
  $region8: #{dqn_forward.1} parent=0 // pred_region
    _
  $region9: #{dqn_forward.1} parent=0 // pred_fallthru
    _
  // Predicated region
  $region10: #{dqn_forward.1} parent=0 // pred_check
    _
  $region11: #{dqn_forward.1} parent=0 // pred_check_branch
    %17 = sbr.rel (0) target = $region13
  $region12: #{dqn_forward.1} parent=0 // pred_region
    _
  $region13: #{dqn_forward.1} parent=0 // pred_fallthru
    _
  // Predicated region
  $region14: #{dqn_forward.1} parent=0 // pred_check
    _
  $region15: #{dqn_forward.1} parent=0 // pred_check_branch
    %19 = sbr.rel (0) target = $region17
  $region16: #{dqn_forward.1} parent=0 // pred_region
    _
  $region17: #{dqn_forward.1} parent=0 // pred_fallthru
    _
  // Predicated region
  $region18: #{dqn_forward.1} parent=0 // pred_check
    _
  $region19: #{dqn_forward.1} parent=0 // pred_check_branch
    %21 = sbr.rel (0) target = $region21
  $region20: #{dqn_forward.1} parent=0 // pred_region
    _
  $region21: #{dqn_forward.1} parent=0 // pred_fallthru
    _
  // Predicated region
  $region22: #{dqn_forward.1} parent=0 // pred_check
    _
  $region23: #{dqn_forward.1} parent=0 // pred_check_branch
    %23 = sbr.rel (0) target = $region25
  $region24: #{dqn_forward.1} parent=0 // pred_region
    _
  $region25: #{dqn_forward.1} parent=0 // pred_fallthru
    _
  // Predicated region
  $region26: #{dqn_forward.1} parent=0 // pred_check
    _
  $region27: #{dqn_forward.1} parent=0 // pred_check_branch
    %25 = sbr.rel (0) target = $region29
  $region28: #{dqn_forward.1} parent=0 // pred_region
    _
  $region29: #{dqn_forward.1} parent=0 // pred_fallthru
    _
  %v27 = vld [vmem:[%s0] sm:$0xff]
  %v28 = vld [vmem:[%s1] sm:$0xf]
  %v29 = vld [vmem:[%s2] sm:$0x1]
  %v31 = vlaneseq
  %v32 = vshrl.u32 %v31, 7
  %v33 = vsub.s32 0, %v32
  %v34 = vrot.slane %v29, %v33
  %vm36 = vcmask 31744
  %v38 = vsel %vm36, %v27, 0
  %vm40 = vcmask 1043456
  %v42 = vsel %vm40, %v28, 0
  %44 = vmatprep.subr.mxu0 0.0
  %45 = vmatpush1.msra.mxu0 0.0
  %46 = vmatprep.subr.mxu0 0.0
  %47 = vmatpush1.msra.mxu0 0.0
  %48 = vmatprep.subr.mxu0 0.0
  %49 = vmatpush1.msra.mxu0 0.0
  %50 = vmatprep.subr.mxu0 0.0
  %51 = vmatpush1.msra.mxu0 0.0
  %52 = vmatprep.subr.mxu0 0.0
  %53 = vmatpush1.msra.mxu0 0.0
  %54 = vmatprep.subr.mxu0 0.0
  %55 = vmatpush1.msra.mxu0 0.0
  %56 = vmatprep.subr.mxu0 0.0
  %57 = vmatpush1.msra.mxu0 0.0
  %58 = vmatprep.subr.mxu0 0.0
  %59 = vmatpush1.msra.mxu0 0.0
  %60 = vmatprep.subr.mxu0 0.0
  %61 = vmatpush1.msra.mxu0 0.0
  %62 = vmatprep.subr.mxu0 0.0
  %63 = vmatpush1.msra.mxu0 0.0
  %64 = vmatprep.subr.mxu0 0.0
  %65 = vmatpush1.msra.mxu0 0.0
  %66 = vmatprep.subr.mxu0 0.0
  %67 = vmatpush1.msra.mxu0 0.0
  %68 = vmatprep.subr.mxu0 0.0
  %69 = vmatpush1.msra.mxu0 0.0
  %70 = vmatprep.subr.mxu0 0.0
  %71 = vmatpush1.msra.mxu0 0.0
  %72 = vmatprep.subr.mxu0 0.0
  %73 = vmatpush1.msra.mxu0 0.0
  %74 = vmatprep.subr.mxu0 0.0
  %75 = vmatpush1.msra.mxu0 %v42
  %76 = vmatprep.subr.mxu0 0.0
  %77 = vmatpush2.msra.mxu0 0.0
  %78 = vmatprep.subr.mxu0 0.0
  %79 = vmatpush2.msra.mxu0 0.0
  %80 = vmatprep.subr.mxu0 0.0
  %81 = vmatpush2.msra.mxu0 0.0
  %82 = vmatprep.subr.mxu0 0.0
  %83 = vmatpush2.msra.mxu0 0.0
  %84 = vmatprep.subr.mxu0 0.0
  %85 = vmatpush2.msra.mxu0 0.0
  %86 = vmatprep.subr.mxu0 0.0
  %87 = vmatpush2.msra.mxu0 0.0
  %88 = vmatprep.subr.mxu0 0.0
  %89 = vmatpush2.msra.mxu0 0.0
  %90 = vmatprep.subr.mxu0 0.0
  %91 = vmatpush2.msra.mxu0 0.0
  %92 = vmatprep.subr.mxu0 0.0
  %93 = vmatpush2.msra.mxu0 0.0
  %94 = vmatprep.subr.mxu0 0.0
  %95 = vmatpush2.msra.mxu0 0.0
  %96 = vmatprep.subr.mxu0 0.0
  %97 = vmatpush2.msra.mxu0 0.0
  %98 = vmatprep.subr.mxu0 0.0
  %99 = vmatpush2.msra.mxu0 0.0
  %100 = vmatprep.subr.mxu0 0.0
  %101 = vmatpush2.msra.mxu0 0.0
  %102 = vmatprep.subr.mxu0 0.0
  %103 = vmatpush2.msra.mxu0 0.0
  %104 = vmatprep.subr.mxu0 0.0
  %105 = vmatpush2.msra.mxu0 0.0
  %106 = vmatprep.subr.mxu0 0.0
  %107 = vmatpush2.msra.mxu0 0.0
  %108 = vmatprep.mubr.f32.mxu0 0.0
  %109 = vmatmul.mubr.f32.gmra.mxu0 %v38
  %v110 = vpop.f32.mrf.mxu0
  %v111 = vadd.f32 %v34, %v110
  %v112 = vpop.f32.mrf.mxu0
  %113 = vdwg.mxu0
  %v114 = vmax.f32 %v111, 0.0
  %v115 = vpack.c.bf16 %v114, %v114
  %v116 = vld [vmem:[%s3] sm:$0xf]
  %v117 = vld [vmem:[%s3 + $0x4] sm:$0xf]
  %v118 = vld [vmem:[%s3 + $0x8] sm:$0xf]
  %v119 = vld [vmem:[%s3 + $0xc] sm:$0xf]
  %v120 = vld [vmem:[%s3 + $0x10] sm:$0xf]
  %v121 = vld [vmem:[%s3 + $0x14] sm:$0xf]
  %v122 = vld [vmem:[%s3 + $0x18] sm:$0xf]
  %v123 = vld [vmem:[%s3 + $0x1c] sm:$0xf]
  %v124 = vld [vmem:[%s4] sm:$0x1]
  %v126 = vlaneseq
  %v127 = vshrl.u32 %v126, 7
  %v128 = vsub.s32 0, %v127
  %v129 = vrot.slane %v124, %v128
  %v139 = vunpack.c.l.b16 %v116
  %v140 = vunpack.c.l.b16 %v117
  %v141 = vunpack.c.l.b16 %v118
  %v142 = vunpack.c.l.b16 %v119
  %v143 = vunpack.c.l.b16 %v120
  %v144 = vunpack.c.l.b16 %v121
  %v145 = vunpack.c.l.b16 %v122
  %v146 = vunpack.c.l.b16 %v123
  %v147 = vpack.c.b16 %v140, %v139
  %v148 = vpack.c.b16 %v142, %v141
  %v149 = vpack.c.b16 %v144, %v143
  %v150 = vpack.c.b16 %v146, %v145
  %vm155 = vcmask 523264
  %v157 = vsel %vm155, %v115, 0
  %159 = vmatprep.subr.bf16.mxu0 0
  %160 = vmatpush1.bf16.msra.mxu0 0
  %161 = vmatprep.subr.bf16.mxu0 0
  %162 = vmatpush1.bf16.msra.mxu0 0
  %163 = vmatprep.subr.bf16.mxu0 0
  %164 = vmatpush1.bf16.msra.mxu0 0
  %165 = vmatprep.subr.bf16.mxu0 0
  %166 = vmatpush1.bf16.msra.mxu0 0
  %167 = vmatprep.subr.bf16.mxu0 0
  %168 = vmatpush1.bf16.msra.mxu0 %v150
  %169 = vmatprep.subr.bf16.mxu0 0
  %170 = vmatpush1.bf16.msra.mxu0 %v149
  %171 = vmatprep.subr.bf16.mxu0 0
  %172 = vmatpush1.bf16.msra.mxu0 %v148
  %173 = vmatprep.subr.bf16.mxu0 0
  %174 = vmatpush1.bf16.msra.mxu0 %v147
  %175 = vmatprep.subr.bf16.mxu0 0
  %176 = vmatpush2.bf16.msra.mxu0 0
  %177 = vmatprep.subr.bf16.mxu0 0
  %178 = vmatpush2.bf16.msra.mxu0 0
  %179 = vmatprep.subr.bf16.mxu0 0
  %180 = vmatpush2.bf16.msra.mxu0 0
  %181 = vmatprep.subr.bf16.mxu0 0
  %182 = vmatpush2.bf16.msra.mxu0 0
  %183 = vmatprep.subr.bf16.mxu0 0
  %184 = vmatpush2.bf16.msra.mxu0 0
  %185 = vmatprep.subr.bf16.mxu0 0
  %186 = vmatpush2.bf16.msra.mxu0 0
  %187 = vmatprep.subr.bf16.mxu0 0
  %188 = vmatpush2.bf16.msra.mxu0 0
  %189 = vmatprep.subr.bf16.mxu0 0
  %190 = vmatpush2.bf16.msra.mxu0 0
  %191 = vmatprep.mubr.bf16.mxu0 0
  %192 = vmatmul.mubr.bf16.gmra.mxu0 %v157
  %v193 = vpop.f32.mrf.mxu0
  %v194 = vadd.f32 %v129, %v193
  %v195 = vpop.f32.mrf.mxu0
  %v196 = vpop.f32.mrf.mxu0
  %v197 = vpop.f32.mrf.mxu0
  %198 = vdwg.mxu0
  %v199 = vmax.f32 %v194, 0.0
  %v200 = vpack.c.bf16 %v199, %v199
  %v201 = vld [vmem:[%s5] sm:$0xf]
  %v202 = vld [vmem:[%s5 + $0x4] sm:$0xf]
  %v203 = vld [vmem:[%s5 + $0x8] sm:$0xf]
  %v204 = vld [vmem:[%s5 + $0xc] sm:$0xf]
  %v205 = vld [vmem:[%s5 + $0x10] sm:$0xf]
  %v206 = vld [vmem:[%s5 + $0x14] sm:$0xf]
  %v207 = vld [vmem:[%s5 + $0x18] sm:$0xf]
  %v208 = vld [vmem:[%s5 + $0x1c] sm:$0xf]
  %v209 = vld [vmem:[%s5 + $0x20] sm:$0xf]
  %v210 = vld [vmem:[%s5 + $0x24] sm:$0xf]
  %v211 = vld [vmem:[%s5 + $0x28] sm:$0xf]
  %v212 = vld [vmem:[%s5 + $0x2c] sm:$0xf]
  %v213 = vld [vmem:[%s5 + $0x30] sm:$0xf]
  %v214 = vld [vmem:[%s5 + $0x34] sm:$0xf]
  %v215 = vld [vmem:[%s5 + $0x38] sm:$0xf]
  %v216 = vld [vmem:[%s5 + $0x3c] sm:$0xf]
  %v217 = vld [vmem:[%s6] sm:$0x1]
  %v219 = vlaneseq
  %v220 = vshrl.u32 %v219, 7
  %v221 = vsub.s32 0, %v220
  %v222 = vrot.slane %v217, %v221
  %v240 = vunpack.c.l.b16 %v201
  %v241 = vunpack.c.l.b16 %v202
  %v242 = vunpack.c.l.b16 %v203
  %v243 = vunpack.c.l.b16 %v204
  %v244 = vunpack.c.l.b16 %v205
  %v245 = vunpack.c.l.b16 %v206
  %v246 = vunpack.c.l.b16 %v207
  %v247 = vunpack.c.l.b16 %v208
  %v248 = vunpack.c.l.b16 %v209
  %v249 = vunpack.c.l.b16 %v210
  %v250 = vunpack.c.l.b16 %v211
  %v251 = vunpack.c.l.b16 %v212
  %v252 = vunpack.c.l.b16 %v213
  %v253 = vunpack.c.l.b16 %v214
  %v254 = vunpack.c.l.b16 %v215
  %v255 = vunpack.c.l.b16 %v216
  %v256 = vpack.c.b16 %v241, %v240
  %v257 = vpack.c.b16 %v243, %v242
  %v258 = vpack.c.b16 %v245, %v244
  %v259 = vpack.c.b16 %v247, %v246
  %v260 = vpack.c.b16 %v249, %v248
  %v261 = vpack.c.b16 %v251, %v250
  %v262 = vpack.c.b16 %v253, %v252
  %v263 = vpack.c.b16 %v255, %v254
  %272 = vmatprep.subr.bf16.mxu0 0
  %273 = vmatpush1.bf16.msra.mxu0 %v263
  %274 = vmatprep.subr.bf16.mxu0 0
  %275 = vmatpush1.bf16.msra.mxu0 %v262
  %276 = vmatprep.subr.bf16.mxu0 0
  %277 = vmatpush1.bf16.msra.mxu0 %v261
  %278 = vmatprep.subr.bf16.mxu0 0
  %279 = vmatpush1.bf16.msra.mxu0 %v260
  %280 = vmatprep.subr.bf16.mxu0 0
  %281 = vmatpush1.bf16.msra.mxu0 %v259
  %282 = vmatprep.subr.bf16.mxu0 0
  %283 = vmatpush1.bf16.msra.mxu0 %v258
  %284 = vmatprep.subr.bf16.mxu0 0
  %285 = vmatpush1.bf16.msra.mxu0 %v257
  %286 = vmatprep.subr.bf16.mxu0 0
  %287 = vmatpush1.bf16.msra.mxu0 %v256
  %288 = vmatprep.subr.bf16.mxu0 0
  %289 = vmatpush2.bf16.msra.mxu0 0
  %290 = vmatprep.subr.bf16.mxu0 0
  %291 = vmatpush2.bf16.msra.mxu0 0
  %292 = vmatprep.subr.bf16.mxu0 0
  %293 = vmatpush2.bf16.msra.mxu0 0
  %294 = vmatprep.subr.bf16.mxu0 0
  %295 = vmatpush2.bf16.msra.mxu0 0
  %296 = vmatprep.subr.bf16.mxu0 0
  %297 = vmatpush2.bf16.msra.mxu0 0
  %298 = vmatprep.subr.bf16.mxu0 0
  %299 = vmatpush2.bf16.msra.mxu0 0
  %300 = vmatprep.subr.bf16.mxu0 0
  %301 = vmatpush2.bf16.msra.mxu0 0
  %302 = vmatprep.subr.bf16.mxu0 0
  %303 = vmatpush2.bf16.msra.mxu0 0
  %304 = vmatprep.mubr.bf16.mxu0 0
  %305 = vmatmul.mubr.bf16.gmra.mxu0 %v200
  %v306 = vpop.f32.mrf.mxu0
  %v307 = vadd.f32 %v222, %v306
  %v308 = vpop.f32.mrf.mxu0
  %v309 = vpop.f32.mrf.mxu0
  %v310 = vpop.f32.mrf.mxu0
  %311 = vdwg.mxu0
  %vm312 = vcmask 15360
  %313 = vst.msk [vmem:[%s7] sm:$0xff] %vm312, %v307
  // Predicated region
  $region30: #{dqn_forward.1} parent=0 // pred_check
    _
  $region31: #{dqn_forward.1} parent=0 // pred_check_branch
    %315 = sbr.rel (0) target = $region33
  $region32: #{dqn_forward.1} parent=0 // pred_region
    _
  $region33: #{dqn_forward.1} parent=0 // pred_fallthru
    _
  // Predicated region
  $region34: #{dqn_forward.1} parent=0 // pred_check
    _
  $region35: #{dqn_forward.1} parent=0 // pred_check_branch
    %317 = sbr.rel (0) target = $region37
  $region36: #{dqn_forward.1} parent=0 // pred_region
    _
  $region37: #{dqn_forward.1} parent=0 // pred_fallthru
    _

</llo_original>
